<compile_context>
chip_gen: v5e
topology: v5e:2x2
jax: 0.10.0
libtpu: 0.0.40
codegen_flags: <defaults>
</compile_context>

<pallas_src>
import functools

import jax
import jax.numpy as jnp
from jax import lax
from jax.experimental import pallas as pl
from jax.experimental.pallas import tpu as pltpu


def _triplet_kernel(a_ref, p_ref, n_ref, o_ref, acc_ref, *, margin, n_rows):
    i = pl.program_id(0)
    tile_n = a_ref.shape[0]

    @pl.when(i == 0)
    def _init():
        acc_ref[0, 0] = jnp.float32(0.0)

    a = a_ref[...].astype(jnp.float32)
    p = p_ref[...].astype(jnp.float32)
    n = n_ref[...].astype(jnp.float32)

    if margin is None:
        d_ap = a - p
        d_an = a - n
    else:
        eps = jnp.float32(1e-6)  # PyTorch pairwise_distance eps placement
        d_ap = a - p + eps
        d_an = a - n + eps

    # (TILE_N, 1) keepdims reductions -> clean (sublane, lane) layouts.
    ap_dist = jnp.sqrt(jnp.sum(d_ap * d_ap, axis=1, keepdims=True))
    an_dist = jnp.sqrt(jnp.sum(d_an * d_an, axis=1, keepdims=True))

    if margin is None:
        x = an_dist - ap_dist
        # Numerically stable softplus(-x) = log(1 + exp(-x)).
        per_row = jnp.maximum(-x, 0.0) + jnp.log1p(jnp.exp(-jnp.abs(x)))
    else:
        per_row = jnp.maximum(ap_dist - an_dist + jnp.float32(margin), 0.0)

    # Mask rows past the true batch size (padded last tile reads garbage).
    row = i * tile_n + lax.broadcasted_iota(jnp.int32, (tile_n, 1), 0)
    per_row = jnp.where(row < n_rows, per_row, 0.0)

    acc_ref[0, 0] += jnp.sum(per_row)

    @pl.when(i == pl.num_programs(0) - 1)
    def _finalize():
        o_ref[0, 0] = acc_ref[0, 0] / jnp.float32(n_rows)


def _pick_tile_n(n, d, itemsize):
    # 3 inputs x 2 pipeline buffers x TILE_N x D x itemsize <= ~16 MiB.
    budget_bytes = 16 * 1024 * 1024
    t = budget_bytes // (6 * d * itemsize)
    t = max(8, (t // 8) * 8)                 # multiple of 8 sublanes
    n_padded = ((n + 7) // 8) * 8            # no point exceeding the batch
    return int(min(t, n_padded))


def triplet_loss(anchor, pos, neg, margin=None, *, tile_n=None):
    """Pallas TPU implementation of TripletLoss.forward.

    anchor/pos/neg: (N, D) arrays (f32 or bf16). Returns a scalar f32 loss.
    """
    assert anchor.shape == pos.shape == neg.shape
    assert anchor.ndim == 2
    n, d = anchor.shape
    itemsize = jnp.dtype(anchor.dtype).itemsize

    if tile_n is None:
        tile_n = _pick_tile_n(n, d, itemsize)
    grid = pl.cdiv(n, tile_n)

    kernel = functools.partial(
        _triplet_kernel,
        margin=None if margin is None else float(margin),
        n_rows=n,
    )

    cost = pl.CostEstimate(
        flops=9 * n * d,
        transcendentals=(4 if margin is None else 2) * n,
        bytes_accessed=3 * n * d * itemsize + 4,
    )

    emb_spec = pl.BlockSpec((tile_n, d), lambda i: (i, 0))

    out = pl.pallas_call(
        kernel,
        out_shape=jax.ShapeDtypeStruct((1, 1), jnp.float32),
        grid=(grid,),
        in_specs=[emb_spec, emb_spec, emb_spec],
        out_specs=pl.BlockSpec(memory_space=pltpu.MemorySpace.SMEM),
        scratch_shapes=[pltpu.SMEM((1, 1), jnp.float32)],
        compiler_params=pltpu.CompilerParams(
            dimension_semantics=("arbitrary",),  # accumulation axis
        ),
        cost_estimate=cost,
    )(anchor, pos, neg)
    return out[0, 0]


def _reference_triplet_loss(anchor, pos, neg, margin=None):
    a = anchor.astype(jnp.float32)
    p = pos.astype(jnp.float32)
    n = neg.astype(jnp.float32)
    if margin is None:
        ap = jnp.linalg.norm(a - p, axis=1)
        an = jnp.linalg.norm(a - n, axis=1)
        return jnp.mean(jax.nn.softplus(-(an - ap)))
    eps = 1e-6
    d_ap = jnp.linalg.norm(a - p + eps, axis=1)
    d_an = jnp.linalg.norm(a - n + eps, axis=1)
    return jnp.mean(jnp.maximum(d_ap - d_an + margin, 0.0))


if __name__ == "__main__":
    key = jax.random.PRNGKey(0)
    ka, kp, kn = jax.random.split(key, 3)

    N, D = 20, 128  # small batch (not a multiple of the tile -> exercises masking)
    anchor = jax.random.normal(ka, (N, D), dtype=jnp.float32)
    pos = jax.random.normal(kp, (N, D), dtype=jnp.float32)
    neg = jax.random.normal(kn, (N, D), dtype=jnp.float32)

    # Mode 1: soft-margin triplet loss (margin=None), forced multi-tile grid.
    loss_soft = jax.block_until_ready(
        triplet_loss(anchor, pos, neg, margin=None, tile_n=8))
    ref_soft = _reference_triplet_loss(anchor, pos, neg, margin=None)
    assert jnp.allclose(loss_soft, ref_soft, rtol=1e-5, atol=1e-5), (
        loss_soft, ref_soft)

    # Mode 2: standard triplet margin loss (margin=1.0, p=2), auto tile size.
    loss_margin = jax.block_until_ready(
        triplet_loss(anchor, pos, neg, margin=1.0))
    ref_margin = _reference_triplet_loss(anchor, pos, neg, margin=1.0)
    assert jnp.allclose(loss_margin, ref_margin, rtol=1e-5, atol=1e-5), (
        loss_margin, ref_margin)

    # bf16 ingestion (memory-bound kernel: half the HBM bytes; f32 accumulate).
    a16, p16, n16 = (x.astype(jnp.bfloat16) for x in (anchor, pos, neg))
    loss_bf16 = jax.block_until_ready(
        triplet_loss(a16, p16, n16, margin=1.0, tile_n=8))
    ref_bf16 = _reference_triplet_loss(a16, p16, n16, margin=1.0)
    assert jnp.allclose(loss_bf16, ref_bf16, rtol=2e-2, atol=2e-2), (
        loss_bf16, ref_bf16)

    print("KERNEL_OK")
</pallas_src>

<mosaic_0001>
module attributes {stable_mosaic.version = 11 : i64} {
  func.func @_triplet_kernel(%arg0: i32, %arg1: memref<8x128xf32, #tpu.memory_space<vmem>>, %arg2: memref<8x128xf32, #tpu.memory_space<vmem>>, %arg3: memref<8x128xf32, #tpu.memory_space<vmem>>, %arg4: memref<1x1xf32, #tpu.memory_space<smem>>, %arg5: memref<1x1xf32, #tpu.memory_space<smem>>) attributes {dimension_semantics = [#tpu.dimension_semantics<arbitrary>], iteration_bounds = array<i64: 3>, scalar_prefetch = 0 : i64, scratch_operands = 1 : i64, tpu.core_type = #tpu.core_type<tc>, window_params = [{transform_indices = @transform_0, window_bounds = array<i64: 8, 128>}, {transform_indices = @transform_1, window_bounds = array<i64: 8, 128>}, {transform_indices = @transform_2, window_bounds = array<i64: 8, 128>}, {transform_indices = @transform_3, window_bounds = array<i64: 1, 1>}]} {
    %c0_i32 = arith.constant 0 : i32
    %0 = arith.cmpi eq, %arg0, %c0_i32 : i32
    %1 = arith.extui %0 : i1 to i32
    %c0_i32_0 = arith.constant 0 : i32
    %2 = arith.cmpi ne, %1, %c0_i32_0 : i32
    scf.if %2 {
      %cst_17 = arith.constant 0.000000e+00 : f32
      %c0_18 = arith.constant 0 : index
      %c0_19 = arith.constant 0 : index
      %45 = memref.load %arg5[%c0_18, %c0_19] : memref<1x1xf32, #tpu.memory_space<smem>>
      memref.store %cst_17, %arg5[%c0_18, %c0_19] : memref<1x1xf32, #tpu.memory_space<smem>>
    } else {
    }
    %c0 = arith.constant 0 : index
    %c0_1 = arith.constant 0 : index
    %3 = vector.load %arg1[%c0, %c0_1] : memref<8x128xf32, #tpu.memory_space<vmem>>, vector<8x128xf32>
    %c0_2 = arith.constant 0 : index
    %c0_3 = arith.constant 0 : index
    %4 = vector.load %arg2[%c0_2, %c0_3] : memref<8x128xf32, #tpu.memory_space<vmem>>, vector<8x128xf32>
    %c0_4 = arith.constant 0 : index
    %c0_5 = arith.constant 0 : index
    %5 = vector.load %arg3[%c0_4, %c0_5] : memref<8x128xf32, #tpu.memory_space<vmem>>, vector<8x128xf32>
    %6 = arith.subf %3, %4 : vector<8x128xf32>
    %7 = arith.subf %3, %5 : vector<8x128xf32>
    %8 = arith.mulf %6, %6 : vector<8x128xf32>
    %cst = arith.constant dense<0.000000e+00> : vector<8xf32>
    %9 = vector.multi_reduction <add>, %8, %cst [1] : vector<8x128xf32> to vector<8xf32>
    %10 = vector.shape_cast %9 : vector<8xf32> to vector<8x1xf32>
    %11 = math.sqrt %10 : vector<8x1xf32>
    %12 = arith.mulf %7, %7 : vector<8x128xf32>
    %cst_6 = arith.constant dense<0.000000e+00> : vector<8xf32>
    %13 = vector.multi_reduction <add>, %12, %cst_6 [1] : vector<8x128xf32> to vector<8xf32>
    %14 = vector.shape_cast %13 : vector<8xf32> to vector<8x1xf32>
    %15 = math.sqrt %14 : vector<8x1xf32>
    %16 = arith.subf %15, %11 : vector<8x1xf32>
    %cst_7 = arith.constant 0.000000e+00 : f32
    %17 = vector.broadcast %cst_7 : f32 to vector<8x1xf32>
    %18 = arith.subf %17, %16 : vector<8x1xf32>
    %cst_8 = arith.constant 0.000000e+00 : f32
    %19 = vector.broadcast %cst_8 : f32 to vector<8x1xf32>
    %20 = arith.maximumf %18, %19 : vector<8x1xf32>
    %21 = math.absf %16 : vector<8x1xf32>
    %cst_9 = arith.constant 0.000000e+00 : f32
    %22 = vector.broadcast %cst_9 : f32 to vector<8x1xf32>
    %23 = arith.subf %22, %21 : vector<8x1xf32>
    %24 = math.exp %23 : vector<8x1xf32>
    %25 = math.log1p %24 : vector<8x1xf32>
    %26 = arith.addf %20, %25 : vector<8x1xf32>
    %c8_i32 = arith.constant 8 : i32
    %27 = arith.muli %arg0, %c8_i32 : i32
    %28 = tpu.iota {dimensions = array<i32: 0>} : vector<8x1xi32>
    %29 = vector.broadcast %27 : i32 to vector<8x1xi32>
    %30 = arith.addi %29, %28 : vector<8x1xi32>
    %c20_i32 = arith.constant 20 : i32
    %31 = vector.broadcast %c20_i32 : i32 to vector<8x1xi32>
    %32 = arith.cmpi slt, %30, %31 : vector<8x1xi32>
    %cst_10 = arith.constant 0.000000e+00 : f32
    %33 = vector.broadcast %cst_10 : f32 to vector<8x1xf32>
    %34 = arith.select %32, %26, %33 : vector<8x1xi1>, vector<8x1xf32>
    %c0_11 = arith.constant 0 : index
    %c0_12 = arith.constant 0 : index
    %35 = memref.load %arg5[%c0_11, %c0_12] : memref<1x1xf32, #tpu.memory_space<smem>>
    %36 = vector.shape_cast %34 : vector<8x1xf32> to vector<1x8x1xf32>
    %cst_13 = arith.constant dense<0.000000e+00> : vector<1xf32>
    %37 = vector.multi_reduction <add>, %36, %cst_13 [1, 2] : vector<1x8x1xf32> to vector<1xf32>
    %38 = vector.shape_cast %37 : vector<1xf32> to vector<1x1x1xf32>
    %39 = vector.extract %38[0, 0, 0] : f32 from vector<1x1x1xf32>
    %40 = arith.addf %35, %39 : f32
    %c0_14 = arith.constant 0 : index
    %c0_15 = arith.constant 0 : index
    %41 = memref.load %arg5[%c0_14, %c0_15] : memref<1x1xf32, #tpu.memory_space<smem>>
    memref.store %40, %arg5[%c0_14, %c0_15] : memref<1x1xf32, #tpu.memory_space<smem>>
    %c2_i32 = arith.constant 2 : i32
    %42 = arith.cmpi eq, %arg0, %c2_i32 : i32
    %43 = arith.extui %42 : i1 to i32
    %c0_i32_16 = arith.constant 0 : i32
    %44 = arith.cmpi ne, %43, %c0_i32_16 : i32
    scf.if %44 {
      %c0_17 = arith.constant 0 : index
      %c0_18 = arith.constant 0 : index
      %45 = memref.load %arg5[%c0_17, %c0_18] : memref<1x1xf32, #tpu.memory_space<smem>>
      %cst_19 = arith.constant 2.000000e+01 : f32
      %46 = arith.divf %45, %cst_19 : f32
      %c0_20 = arith.constant 0 : index
      %c0_21 = arith.constant 0 : index
      %47 = memref.load %arg4[%c0_20, %c0_21] : memref<1x1xf32, #tpu.memory_space<smem>>
      memref.store %46, %arg4[%c0_20, %c0_21] : memref<1x1xf32, #tpu.memory_space<smem>>
    } else {
    }
    return
  }
  func.func @transform_0(%arg0: i32) -> (i32, i32) {
    %c0_i32 = arith.constant 0 : i32
    %c0_i32_0 = arith.constant 0 : i32
    return %arg0, %c0_i32 : i32, i32
  }
  func.func @transform_1(%arg0: i32) -> (i32, i32) {
    %c0_i32 = arith.constant 0 : i32
    %c0_i32_0 = arith.constant 0 : i32
    return %arg0, %c0_i32 : i32, i32
  }
  func.func @transform_2(%arg0: i32) -> (i32, i32) {
    %c0_i32 = arith.constant 0 : i32
    %c0_i32_0 = arith.constant 0 : i32
    return %arg0, %c0_i32 : i32, i32
  }
  func.func @transform_3(%arg0: i32) -> (i32, i32) {
    %c0_i32 = arith.constant 0 : i32
    %c0_i32_0 = arith.constant 0 : i32
    %c0_i32_1 = arith.constant 0 : i32
    return %c0_i32, %c0_i32_0 : i32, i32
  }
}

</mosaic_0001>

<llo_original>
// kernel: tpu_custom_call.1
$region0: #{tpu_custom_call.1}
  #allocation0 [shape = 'u32[]', space=smem, size = 0x4, offset = 0x4, fixed_abs, tag = 'smem constant byte address 0x4 - core index']
  #allocation1 [shape = 'u32[72,128]{1,0:T(1,128)}', space=vmem, size = 0x9000, scoped, tag = 'internal scratch']
  #allocation2 [shape = 'f32[1,1]{1,0:T(1,128)}', space=smem, size = 0x200, scoped, tag = 'scratch operand']
  %s0 = inlined_call_operand.hbm [shape: f32[20,128], index: 0, kind: input, shape index: {}]
  %s1 = inlined_call_operand.hbm [shape: f32[20,128], index: 1, kind: input, shape index: {}]
  %s2 = inlined_call_operand.hbm [shape: f32[20,128], index: 2, kind: input, shape index: {}]
  %s3 = inlined_call_operand.hbm [shape: f32[1,1], index: 3, kind: output, shape index: {}]
  %s4 = sld [smem:[#allocation0]]
  $region65: #{tpu_custom_call.1} parent=0
    _
  %s6 = ssub.s32 1, %s4
  %s7 = scalar_select 0, %s6, %s4
  $region1: #{tpu_custom_call.1} parent=0
    #allocation3 [shape = 'u8[8192]{0}', space=vmem, size = 0x2000, scoped, tag = 'input window, operand 0']
    #allocation4 [shape = 's32[2]{0}', space=sflag, size = 0x8, scoped, tag = 'scoped memory for tpu_custom_call.1']
    #allocation5 [shape = 's32[2]{0}', space=sflag, size = 0x8, scoped, tag = 'scoped memory for tpu_custom_call.1']
    #allocation6 [shape = 'u8[8192]{0}', space=vmem, size = 0x2000, scoped, tag = 'input window, operand 1']
    #allocation7 [shape = 's32[2]{0}', space=sflag, size = 0x8, scoped, tag = 'scoped memory for tpu_custom_call.1']
    #allocation8 [shape = 'u8[8192]{0}', space=vmem, size = 0x2000, scoped, tag = 'input window, operand 2']
    #allocation9 [shape = 'u8[512]{0}', space=smem, size = 0x200, scoped, tag = 'output window, operand 0, single buffered']
    %8 = vsyncpa [#allocation4], 0
    %s9 = scalar_lea.sflag [#allocation4], 1
    %10 = vsyncpa %s9, 0
    %11 = vsyncpa [#allocation7], 0
    %s12 = scalar_lea.sflag [#allocation7], 1
    %13 = vsyncpa %s12, 0
    %14 = vsyncpa [#allocation5], 0
    loop: start=0, step=1, limit=5
    $region2: #{tpu_custom_call.1} parent=1 // loop_pre_header
      _
    $region3: #{tpu_custom_call.1} parent=1 // loop_header
      %s16 = sphi 0, %s20
      %p17 = scmp.ge.s32.totalorder %s16, 5
      %s26 = sphi 0, %s28
      %s29 = sphi 0, %s26
      %s30 = sphi 0, %s29
      %s46 = sphi 0, %s30
      %s52 = sphi 0, %s54
      %s55 = sphi 0, %s52
      %s56 = sphi 0, %s55
      %s72 = sphi 0, %s56
      %s78 = sphi 0, %s80
      %s81 = sphi 0, %s78
      %s82 = sphi 0, %s81
      %s98 = sphi 0, %s82
      %s102 = sphi 0, %s102
      %s104 = sphi 0, %s102
      %s105 = sphi 0, %s104
      %s119 = sphi 0, %s105
    $region4: #{tpu_custom_call.1} parent=1 // loop_header_branch
      %19 = sbr.rel (%p17) target = $region8
    $region5: #{tpu_custom_call.1} parent=1 // loop_body
      %s21 = ssub.s32 %s16, 1
      %s22 = ssub.s32 %s16, 2
      %s23 = sadd.s32 %s16, 1
      %s24 = ssub.s32 %s16, %s23
      %p25 = scmp.eq.s32.totalorder %s24, 0
      %s27 = sadd.s32 %s26, 1
      %s28 = scalar_select %p25, %s26, %s27
      %p31 = pneg %p25
      %p32 = scmp.eq.s32.totalorder %s16, 2
      %p33 = por %p31, %p32
      %p34 = scmp.ne.s32.totalorder %s26, %s29
      %p35 = scmp.eq.s32.totalorder %s16, 0
      %p36 = por %p34, %p35
      %p37 = scmp.ne.s32.totalorder %s26, %s29
      %p38 = scmp.eq.s32.totalorder %s21, 2
      %p39 = por %p37, %p38
      %p40 = scmp.ne.s32.totalorder %s29, %s30
      %p41 = scmp.eq.s32.totalorder %s21, 0
      %p42 = por %p40, %p41
      %p43 = scmp.ne.s32.totalorder %s29, %s30
      %p44 = scmp.eq.s32.totalorder %s22, 2
      %p45 = por %p43, %p44
      %p47 = scmp.ne.s32.totalorder %s30, %s46
      %p48 = scmp.eq.s32.totalorder %s22, 0
      %p49 = por %p47, %p48
      %s50 = ssub.s32 %s16, %s23
      %p51 = scmp.eq.s32.totalorder %s50, 0
      %s53 = sadd.s32 %s52, 1
      %s54 = scalar_select %p51, %s52, %s53
      %p57 = pneg %p51
      %p58 = scmp.eq.s32.totalorder %s16, 2
      %p59 = por %p57, %p58
      %p60 = scmp.ne.s32.totalorder %s52, %s55
      %p61 = scmp.eq.s32.totalorder %s16, 0
      %p62 = por %p60, %p61
      %p63 = scmp.ne.s32.totalorder %s52, %s55
      %p64 = scmp.eq.s32.totalorder %s21, 2
      %p65 = por %p63, %p64
      %p66 = scmp.ne.s32.totalorder %s55, %s56
      %p67 = scmp.eq.s32.totalorder %s21, 0
      %p68 = por %p66, %p67
      %p69 = scmp.ne.s32.totalorder %s55, %s56
      %p70 = scmp.eq.s32.totalorder %s22, 2
      %p71 = por %p69, %p70
      %p73 = scmp.ne.s32.totalorder %s56, %s72
      %p74 = scmp.eq.s32.totalorder %s22, 0
      %p75 = por %p73, %p74
      %s76 = ssub.s32 %s16, %s23
      %p77 = scmp.eq.s32.totalorder %s76, 0
      %s79 = sadd.s32 %s78, 1
      %s80 = scalar_select %p77, %s78, %s79
      %p83 = pneg %p77
      %p84 = scmp.eq.s32.totalorder %s16, 2
      %p85 = por %p83, %p84
      %p86 = scmp.ne.s32.totalorder %s78, %s81
      %p87 = scmp.eq.s32.totalorder %s16, 0
      %p88 = por %p86, %p87
      %p89 = scmp.ne.s32.totalorder %s78, %s81
      %p90 = scmp.eq.s32.totalorder %s21, 2
      %p91 = por %p89, %p90
      %p92 = scmp.ne.s32.totalorder %s81, %s82
      %p93 = scmp.eq.s32.totalorder %s21, 0
      %p94 = por %p92, %p93
      %p95 = scmp.ne.s32.totalorder %s81, %s82
      %p96 = scmp.eq.s32.totalorder %s22, 2
      %p97 = por %p95, %p96
      %p99 = scmp.ne.s32.totalorder %s82, %s98
      %p100 = scmp.eq.s32.totalorder %s22, 0
      %p101 = por %p99, %p100
      %s103 = sadd.s32 %s102, 1
      %p106 = scmp.eq.s32.totalorder %s16, 2
      %p107 = scmp.ne.s32.totalorder %s102, %s104
      %p108 = scmp.eq.s32.totalorder %s16, 0
      %p109 = por %p107, %p108
      %p110 = scmp.ne.s32.totalorder %s102, %s104
      %p111 = scmp.eq.s32.totalorder %s21, 2
      %p112 = por %p110, %p111
      %p113 = scmp.ne.s32.totalorder %s104, %s105
      %p114 = scmp.eq.s32.totalorder %s21, 0
      %p115 = por %p113, %p114
      %p116 = scmp.ne.s32.totalorder %s104, %s105
      %p117 = scmp.eq.s32.totalorder %s22, 2
      %p118 = por %p116, %p117
      %p120 = scmp.ne.s32.totalorder %s105, %s119
      %p121 = scmp.eq.s32.totalorder %s22, 0
      %p122 = por %p120, %p121
      %p123 = scmp.le.s32.totalorder 1, %s16
      %p124 = scmp.lt.s32.totalorder %s16, 4
      %p125 = pnand %p123, %p124
      %p126 = pneg %p125
      // Predicated region
      $region9: #{tpu_custom_call.1} parent=5 // pred_check
        _
      $region10: #{tpu_custom_call.1} parent=5 // pred_check_branch
        %128 = sbr.rel (%p125) target = $region12
      $region11: #{tpu_custom_call.1} parent=5 // pred_region
        %s129 = ssub.s32 %s16, 1
      $region12: #{tpu_custom_call.1} parent=5 // pred_fallthru
        _
      %p130 = scmp.lt.s32.totalorder %s16, 3
      // Predicated region
      $region13: #{tpu_custom_call.1} parent=5 // pred_check
        %p131 = pneg %p130
      $region14: #{tpu_custom_call.1} parent=5 // pred_check_branch
        %133 = sbr.rel (%p131) target = $region16
      $region15: #{tpu_custom_call.1} parent=5 // pred_region
        // Predicated region
        $region17: #{tpu_custom_call.1} parent=15 // pred_check
          %p134 = pneg %p36
        $region18: #{tpu_custom_call.1} parent=15 // pred_check_branch
          %136 = sbr.rel (%p134) target = $region20
        $region19: #{tpu_custom_call.1} parent=15 // pred_region
          %s137 = sand.u32 %s26, 1
          %s138 = scalar_lea.sflag [#allocation4], %s137
          %s139 = sand.u32 %s26, 1
          %s140 = smul.addr %s139, 8
          %s141 = scalar_lea.vmem [#allocation3], %s140
          %143 = vsyncadd %s138, 0
          %s144 = smul.addr %s16, 8
          %s145 = scalar_lea.hbm %s0, %s144
          %s147 = sshll.u32 %s145, 4
          %s148 = int_to_ptr.hbm [resolvable:$true] %s147
          %s149 = sshll.u32 %s141, 4
          %s150 = int_to_ptr.vmem [resolvable:$true] %s149
          %152 = dma.hbm_to_vmem [thread:$0]  %s148, 128, %s150, %s138
        $region20: #{tpu_custom_call.1} parent=15 // pred_fallthru
          _
        // Predicated region
        $region21: #{tpu_custom_call.1} parent=15 // pred_check
          %p153 = pneg %p62
        $region22: #{tpu_custom_call.1} parent=15 // pred_check_branch
          %155 = sbr.rel (%p153) target = $region24
        $region23: #{tpu_custom_call.1} parent=15 // pred_region
          %s156 = sand.u32 %s16, 1
          %s157 = scalar_lea.sflag [#allocation7], %s156
          %s158 = sand.u32 %s52, 1
          %s159 = smul.addr %s158, 8
          %s160 = scalar_lea.vmem [#allocation6], %s159
          %162 = vsyncadd %s157, 0
          %s163 = smul.addr %s16, 8
          %s164 = scalar_lea.hbm %s1, %s163
          %s166 = sshll.u32 %s164, 4
          %s167 = int_to_ptr.hbm [resolvable:$true] %s166
          %s168 = sshll.u32 %s160, 4
          %s169 = int_to_ptr.vmem [resolvable:$true] %s168
          %171 = dma.hbm_to_vmem [thread:$0]  %s167, 128, %s169, %s157
        $region24: #{tpu_custom_call.1} parent=15 // pred_fallthru
          _
        // Predicated region
        $region25: #{tpu_custom_call.1} parent=15 // pred_check
          %p172 = pneg %p88
        $region26: #{tpu_custom_call.1} parent=15 // pred_check_branch
          %174 = sbr.rel (%p172) target = $region28
        $region27: #{tpu_custom_call.1} parent=15 // pred_region
          %s175 = sand.u32 %s16, 1
          %s176 = scalar_lea.sflag [#allocation7], %s175
          %s177 = sand.u32 %s78, 1
          %s178 = smul.addr %s177, 8
          %s179 = scalar_lea.vmem [#allocation8], %s178
          %181 = vsyncadd %s176, 0
          %s182 = smul.addr %s16, 8
          %s183 = scalar_lea.hbm %s2, %s182
          %s185 = sshll.u32 %s183, 4
          %s186 = int_to_ptr.hbm [resolvable:$true] %s185
          %s187 = sshll.u32 %s179, 4
          %s188 = int_to_ptr.vmem [resolvable:$true] %s187
          %190 = dma.hbm_to_vmem [thread:$0]  %s186, 128, %s188, %s176
        $region28: #{tpu_custom_call.1} parent=15 // pred_fallthru
          _
      $region16: #{tpu_custom_call.1} parent=5 // pred_fallthru
        _
      %p191 = scmp.le.s32.totalorder 1, %s16
      %p192 = scmp.lt.s32.totalorder %s16, 4
      %p193 = pnand %p191, %p192
      %p194 = pneg %p193
      // Predicated region
      $region29: #{tpu_custom_call.1} parent=5 // pred_check
        _
      $region30: #{tpu_custom_call.1} parent=5 // pred_check_branch
        %196 = sbr.rel (%p193) target = $region32
      $region31: #{tpu_custom_call.1} parent=5 // pred_region
        %s197 = ssub.s32 %s16, 1
        %s198 = sand.u32 %s29, 1
        %s199 = scalar_lea.sflag [#allocation4], %s198
        %s200 = sand.u32 %s29, 1
        %s201 = smul.addr %s200, 8
        %s202 = scalar_lea.vmem [#allocation3], %s201
        // Predicated region
        $region33: #{tpu_custom_call.1} parent=31 // pred_check
          %p203 = pneg %p42
        $region34: #{tpu_custom_call.1} parent=31 // pred_check_branch
          %205 = sbr.rel (%p203) target = $region36
        $region35: #{tpu_custom_call.1} parent=31 // pred_region
          %207 = dma.done %s199, 128
        $region36: #{tpu_custom_call.1} parent=31 // pred_fallthru
          _
        %s208 = sand.u32 %s21, 1
        %s209 = scalar_lea.sflag [#allocation7], %s208
        %s210 = sand.u32 %s55, 1
        %s211 = smul.addr %s210, 8
        %s212 = scalar_lea.vmem [#allocation6], %s211
        // Predicated region
        $region37: #{tpu_custom_call.1} parent=31 // pred_check
          %p213 = pneg %p68
        $region38: #{tpu_custom_call.1} parent=31 // pred_check_branch
          %215 = sbr.rel (%p213) target = $region40
        $region39: #{tpu_custom_call.1} parent=31 // pred_region
          %217 = dma.done %s209, 128
        $region40: #{tpu_custom_call.1} parent=31 // pred_fallthru
          _
        %s218 = sand.u32 %s21, 1
        %s219 = scalar_lea.sflag [#allocation7], %s218
        %s220 = sand.u32 %s81, 1
        %s221 = smul.addr %s220, 8
        %s222 = scalar_lea.vmem [#allocation8], %s221
        // Predicated region
        $region41: #{tpu_custom_call.1} parent=31 // pred_check
          %p223 = pneg %p94
        $region42: #{tpu_custom_call.1} parent=31 // pred_check_branch
          %225 = sbr.rel (%p223) target = $region44
        $region43: #{tpu_custom_call.1} parent=31 // pred_region
          %227 = dma.done %s219, 128
        $region44: #{tpu_custom_call.1} parent=31 // pred_fallthru
          _
        %s228 = sand.u32 %s29, 1
        %s229 = scalar_lea.sflag [#allocation4], %s228
        %s230 = sand.u32 %s29, 1
        %s231 = smul.addr %s230, 8
        %s232 = scalar_lea.vmem [#allocation3], %s231
        %p233 = pneg %p42
        %p234 = pneg %p39
        %s235 = sand.u32 %s21, 1
        %s236 = scalar_lea.sflag [#allocation7], %s235
        %s237 = sand.u32 %s55, 1
        %s238 = smul.addr %s237, 8
        %s239 = scalar_lea.vmem [#allocation6], %s238
        %p240 = pneg %p68
        %p241 = pneg %p65
        %s242 = sand.u32 %s21, 1
        %s243 = scalar_lea.sflag [#allocation7], %s242
        %s244 = sand.u32 %s81, 1
        %s245 = smul.addr %s244, 8
        %s246 = scalar_lea.vmem [#allocation8], %s245
        %p247 = pneg %p94
        %p248 = pneg %p91
        %p249 = pneg %p115
        %p250 = pneg %p112
        %p251 = scmp.eq.s32.totalorder %s21, 0
        // Predicated region
        $region45: #{tpu_custom_call.1} parent=31 // pred_check
          %p252 = pneg %p251
        $region46: #{tpu_custom_call.1} parent=31 // pred_check_branch
          %254 = sbr.rel (%p252) target = $region48
        $region47: #{tpu_custom_call.1} parent=31 // pred_region
          %s255 = scalar_lea.smem [#allocation2], 0
          %256 = sst [smem:[%s255]] 0.0
        $region48: #{tpu_custom_call.1} parent=31 // pred_fallthru
          _
        %v257 = vld [vmem:[%s202] sm:$0xff]
        %v258 = vld [vmem:[%s212] sm:$0xff]
        %v259 = vld [vmem:[%s222] sm:$0xff]
        %v260 = vsub.f32 %v257, %v258
        %v261 = vsub.f32 %v257, %v259
        %v262 = vmul.f32 %v260, %v260
        %263 = vadd.xlane.f32.xlu0 %v262
        %v264 = vpop.xlane.xlu0 %263
        %v265 = vrsqrt.pop %v264
        %v266 = vmul.f32 %v265, %v264
        %v267 = vmul.f32 %v266, %v265
        %v268 = vmul.f32 0.5, %v267
        %v269 = vsub.f32 1.5, %v268
        %v270 = vmul.f32 %v265, %v269
        %v271 = vmul.f32 %v264, %v270
        %vm272 = vcmp.eq.f32.partialorder %v264, inf
        %v273 = vsel %vm272, %v264, %v271
        %vm274 = vcmp.eq.f32.partialorder %v264, 0.0
        %v275 = vand.u32 %v264, 2147483648
        %v276 = vsel %vm274, %v275, %v273
        %v277 = vmul.f32 %v261, %v261
        %278 = vadd.xlane.f32.xlu0 %v277
        %v279 = vpop.xlane.xlu0 %278
        %v280 = vrsqrt.pop %v279
        %v281 = vmul.f32 %v280, %v279
        %v282 = vmul.f32 %v281, %v280
        %v283 = vmul.f32 0.5, %v282
        %v284 = vsub.f32 1.5, %v283
        %v285 = vmul.f32 %v280, %v284
        %v286 = vmul.f32 %v279, %v285
        %vm287 = vcmp.eq.f32.partialorder %v279, inf
        %v288 = vsel %vm287, %v279, %v286
        %vm289 = vcmp.eq.f32.partialorder %v279, 0.0
        %v290 = vand.u32 %v279, 2147483648
        %v291 = vsel %vm289, %v290, %v288
        %v292 = vsub.f32 %v291, %v276
        %v293 = vsub.f32 0.0, %v292
        %v294 = vmax.f32 %v293, 0.0
        %v295 = vand.u32 2147483647, %v292
        %v296 = vsub.f32 0.0, %v295
        %v297 = vmul.f32 %v296, 1.442695
        %v298 = vpow.pop %v297
        %v299 = vadd.f32 %v298, 1.0
        %v300 = vlog2.pop %v299
        %v301 = vmul.f32 %v300, 0.6931472
        %v302 = vmul.f32 -0.5, %v298
        %v303 = vadd.f32 %v302, 1.0
        %v304 = vmul.f32 %v303, %v298
        %v305 = vand.u32 2147483647, %v298
        %vm306 = vcmp.lt.f32.partialorder %v305, 0.0004427343
        %v307 = vsel %vm306, %v304, %v301
        %v308 = vadd.f32 %v294, %v307
        %s309 = smul.u32 %s21, 8
        %v310 = vlaneseq
        %v311 = vshrl.u32 %v310, 7
        %v312 = vstv %s309
        %v313 = vadd.s32 %v312, %v311
        %vm314 = vcmp.lt.s32.totalorder %v313, 20
        %v315 = vsel %vm314, %v308, 0.0
        %s316 = sld [smem:[#allocation2]]
        %vm317 = vcmask 7168
        %v318 = vsel %vm317, %v315, 0.0
        %319 = vadd.xlane.f32.xlu0 %v318
        %v320 = vpop.xlane.xlu0 %319
        %v321 = vrot.slane %v320, 4
        %v322 = vadd.f32 %v320, %v321
        %v323 = vrot.slane %v322, 2
        %v324 = vadd.f32 %v322, %v323
        %v325 = vrot.slane %v324, 1
        %v326 = vadd.f32 %v324, %v325
        %s327 = vtos %v326
        %s328 = sadd.f32 %s316, %s327
        %s329 = scalar_lea.smem [#allocation2], 0
        %330 = sst [smem:[%s329]] %s328
        %p331 = scmp.eq.s32.totalorder %s21, 2
        // Predicated region
        $region49: #{tpu_custom_call.1} parent=31 // pred_check
          %p332 = pneg %p331
        $region50: #{tpu_custom_call.1} parent=31 // pred_check_branch
          %334 = sbr.rel (%p332) target = $region52
        $region51: #{tpu_custom_call.1} parent=31 // pred_region
          %s335 = sld [smem:[#allocation2]]
          %v336 = vrcp.pop 20.0
          %v337 = vmul.f32 20.0, %v336
          %v338 = vsub.f32 1.0, %v337
          %v339 = vmul.f32 %v336, %v338
          %v340 = vadd.f32 %v336, %v339
          %vm341 = vweird.f32 %v336
          %v342 = vsel %vm341, %v336, %v340
          %s343 = vtos %v342
          %s344 = smul.f32 %s335, %s343
          %s345 = scalar_lea.smem [#allocation9], 0
          %346 = sst [smem:[%s345]] %s344
        $region52: #{tpu_custom_call.1} parent=31 // pred_fallthru
          _
        // Predicated region
        $region53: #{tpu_custom_call.1} parent=31 // pred_check
          %p347 = pneg %p112
        $region54: #{tpu_custom_call.1} parent=31 // pred_check_branch
          %349 = sbr.rel (%p347) target = $region56
        $region55: #{tpu_custom_call.1} parent=31 // pred_region
          %351 = vsyncadd [#allocation5], 0
          %s353 = sshll.u32 %s3, 4
          %s354 = int_to_ptr.hbm [resolvable:$true] %s353
          %356 = dma.smem_to_hbm [#allocation9], 16, %s354, [#allocation5]
        $region56: #{tpu_custom_call.1} parent=31 // pred_fallthru
          _
        // Predicated region
        $region57: #{tpu_custom_call.1} parent=31 // pred_check
          %p357 = pneg %p112
        $region58: #{tpu_custom_call.1} parent=31 // pred_check_branch
          %359 = sbr.rel (%p357) target = $region60
        $region59: #{tpu_custom_call.1} parent=31 // pred_region
          %361 = dma.done [#allocation5], 16
        $region60: #{tpu_custom_call.1} parent=31 // pred_fallthru
          _
        %362 = sfence
      $region32: #{tpu_custom_call.1} parent=5 // pred_fallthru
        _
      %p363 = scmp.le.s32.totalorder 2, %s16
      // Predicated region
      $region61: #{tpu_custom_call.1} parent=5 // pred_check
        %p364 = pneg %p363
      $region62: #{tpu_custom_call.1} parent=5 // pred_check_branch
        %366 = sbr.rel (%p364) target = $region64
      $region63: #{tpu_custom_call.1} parent=5 // pred_region
        %s367 = ssub.s32 %s16, 2
      $region64: #{tpu_custom_call.1} parent=5 // pred_fallthru
        _
    $region6: #{tpu_custom_call.1} parent=1 // loop_footer
      %s20 = sadd.s32 1, %s16
    $region7: #{tpu_custom_call.1} parent=1 // loop_footer_branch
      %15 = sbr.rel target = $region3
    $region8: #{tpu_custom_call.1} parent=1 // loop_exit
      _
    %368 = vsyncpa [#allocation4], 1
    %s369 = scalar_lea.sflag [#allocation4], 1
    %370 = vsyncpa %s369, 1
    %371 = vsyncpa [#allocation7], 1
    %s372 = scalar_lea.sflag [#allocation7], 1
    %373 = vsyncpa %s372, 1
    %374 = vsyncpa [#allocation5], 1
    %s375 = scalar_lea.sflag [#allocation5], 1
    %376 = vsyncpa %s375, 1

</llo_original>
